<compile_context>
chip_gen: v7x
topology: tpu7x:2x2x1
jax: 0.10.0
libtpu: 0.0.40
codegen_flags: <defaults>
</compile_context>

<pallas_src>
import functools
import math

import jax
import jax.numpy as jnp
from jax.experimental import pallas as pl
from jax.experimental.pallas import tpu as pltpu


def _round_up(x, m):
    return ((x + m - 1) // m) * m


def _sublane_align(dtype):
    # f32 -> 8, bf16 -> 16, int8/fp8 -> 32 (native sublane packing).
    return max(8, 32 // jnp.dtype(dtype).itemsize)


@functools.lru_cache(maxsize=None)
def _chip_params():
    """(target_block_bytes, vmem_limit_bytes) tuned to this TPU generation."""
    vmem_cap = None
    try:
        info = pltpu.get_tpu_info()
        for attr in ("vmem_capacity_bytes", "vmem_size_bytes", "vmem_bytes"):
            v = getattr(info, attr, None)
            if v:
                vmem_cap = int(v)
                break
    except Exception:
        vmem_cap = None
    if vmem_cap is None:
        try:
            kind = jax.devices()[0].device_kind.lower()
            if ("v5" in kind) or ("v6" in kind):
                vmem_cap = 128 * 1024 * 1024
        except Exception:
            pass
    if vmem_cap is not None and vmem_cap >= 100 * 1024 * 1024:
        # v5e / v6e: 128 MiB physical VMEM.
        return 6 * 1024 * 1024, 96 * 1024 * 1024
    # v7x (64 MiB physical) or unknown: conservative values that are safe everywhere.
    return 4 * 1024 * 1024, 48 * 1024 * 1024


def _pick_tile(n, unit_bytes, align, target_bytes, min_blocks=1):
    """Largest tile (multiple of `align`) covering ~target_bytes of VMEM, optionally
    capped so cdiv(n, tile) >= min_blocks (keeps both v7x TensorCores busy)."""
    t = max(align, (target_bytes // max(unit_bytes, 1)) // align * align)
    if min_blocks > 1:
        cap = _round_up(pl.cdiv(n, min_blocks), align)
        t = max(align, min(t, cap))
    # A full-extent block (block dim == array dim) is always legal, even if ragged.
    return n if t >= n else t


# ---------------------------------------------------------------------------
# Kernels
# ---------------------------------------------------------------------------

def _ln_rows_kernel(x_ref, w_ref, b_ref, o_ref, *, eps):
    # x_ref: (tile_rows, C); normalize each row over C (lane axis).
    # Lane reductions go through the XLU; at v5e/v6e HBM rates this is hidden.
    # TODO(synk): on v7x verify XLU slot utilization; if binding, offload the two
    # lane reductions to ones-vector MXU matmuls (MXU is idle on this path).
    x = x_ref[...].astype(jnp.float32)
    u = jnp.mean(x, axis=-1, keepdims=True)
    xc = x - u
    s = jnp.mean(xc * xc, axis=-1, keepdims=True)        # biased variance
    y = xc * jax.lax.rsqrt(s + eps)
    w = w_ref[...].astype(jnp.float32)
    b = b_ref[...].astype(jnp.float32)
    o_ref[...] = (y * w + b).astype(o_ref.dtype)


def _ln_packed_kernel(x_ref, w_ref, b_ref, o_ref, *, k, c, eps):
    # x_ref: (tile, k*C) -- each row holds k pixels x C channels (lane-dense).
    # 0/1 pixel-membership matrices are built in-kernel (cheap VPU iota/compare,
    # no HBM constants); the per-pixel reduce/broadcast rides the otherwise-idle MXU.
    kc = k * c
    inv_c = 1.0 / c
    hi = jax.lax.Precision.HIGHEST

    slot_pix = jax.lax.broadcasted_iota(jnp.int32, (kc, k), 0) // c
    pix_id = jax.lax.broadcasted_iota(jnp.int32, (kc, k), 1)
    seg = (slot_pix == pix_id).astype(jnp.float32)        # (kc, k)
    slot_pix_t = jax.lax.broadcasted_iota(jnp.int32, (k, kc), 1) // c
    pix_id_t = jax.lax.broadcasted_iota(jnp.int32, (k, kc), 0)
    segt = (slot_pix_t == pix_id_t).astype(jnp.float32)   # (k, kc)

    x = x_ref[...].astype(jnp.float32)
    if x_ref.dtype == jnp.bfloat16:
        # bf16 x * {0,1} seg products are exact; f32 MXU accumulation; single pass
        # (keeps v5e's 197 TF/s MXU far from becoming the binding unit).
        sum_g = jnp.dot(x_ref[...], seg.astype(jnp.bfloat16),
                        preferred_element_type=jnp.float32)
    else:
        sum_g = jnp.dot(x, seg, preferred_element_type=jnp.float32, precision=hi)
    # Per-pixel mean, broadcast back to every channel slot of its pixel.
    mean = jnp.dot(sum_g * inv_c, segt, preferred_element_type=jnp.float32, precision=hi)
    xc = x - mean                                          # no cross-row mixing
    var_g = jnp.dot(xc * xc, seg, preferred_element_type=jnp.float32, precision=hi) * inv_c
    rstd = jnp.dot(jax.lax.rsqrt(var_g + eps), segt,
                   preferred_element_type=jnp.float32, precision=hi)
    o_ref[...] = (xc * rstd * w_ref[...] + b_ref[...]).astype(o_ref.dtype)


def _ln_cf_kernel(x_ref, w_ref, b_ref, o_ref, *, eps):
    # x_ref: (tile_b, C, tile_hw); reduce over channels (axis=1), spatial stays on
    # the lane axis -> lane-dense unmasked stores, no NCHW<->NHWC transposes.
    x = x_ref[...].astype(jnp.float32)
    u = jnp.mean(x, axis=1, keepdims=True)
    xc = x - u
    s = jnp.mean(xc * xc, axis=1, keepdims=True)
    y = xc * jax.lax.rsqrt(s + eps)
    w = w_ref[...].astype(jnp.float32)        # (1, C, 1)
    b = b_ref[...].astype(jnp.float32)
    o_ref[...] = (y * w + b).astype(o_ref.dtype)


# ---------------------------------------------------------------------------
# Wrappers
# ---------------------------------------------------------------------------

def _layernorm_rows_simple(x2d, weight, bias, eps, min_blocks=2):
    rows, c = x2d.shape
    itemsize = x2d.dtype.itemsize
    target, vmem_limit = _chip_params()
    # VMEM pads the lane (last) dim to 128 -> budget with the padded width.
    tile_rows = _pick_tile(rows, _round_up(c, 128) * itemsize,
                           _sublane_align(x2d.dtype), target, min_blocks=min_blocks)
    grid = (pl.cdiv(rows, tile_rows),)

    w2d = weight.reshape(1, c)
    b2d = bias.reshape(1, c)

    cost = pl.CostEstimate(
        flops=8 * rows * c,
        transcendentals=rows,
        bytes_accessed=2 * rows * c * itemsize + 2 * c * weight.dtype.itemsize)

    return pl.pallas_call(
        functools.partial(_ln_rows_kernel, eps=eps),
        out_shape=jax.ShapeDtypeStruct((rows, c), x2d.dtype),
        grid_spec=pltpu.PrefetchScalarGridSpec(
            num_scalar_prefetch=0,
            grid=grid,
            in_specs=[
                pl.BlockSpec((tile_rows, c), lambda i: (i, 0)),
                pl.BlockSpec((1, c), lambda i: (0, 0)),
                pl.BlockSpec((1, c), lambda i: (0, 0)),
            ],
            out_specs=pl.BlockSpec((tile_rows, c), lambda i: (i, 0)),
        ),
        compiler_params=pltpu.CompilerParams(
            dimension_semantics=("parallel",),
            vmem_limit_bytes=vmem_limit),
        cost_estimate=cost,
    )(x2d, w2d, b2d)


def _layernorm_rows_packed(x2d, weight, bias, eps, k):
    rows, c = x2d.shape
    kc = k * c
    rp = rows // k
    xp = x2d.reshape(rp, kc)        # contiguous row-major reshape: no HBM copy

    # Pre-cast / tile params once outside the kernel (tiny, resident in VMEM).
    w_tiled = jnp.tile(weight.astype(jnp.float32).reshape(-1), k).reshape(1, kc)
    b_tiled = jnp.tile(bias.astype(jnp.float32).reshape(-1), k).reshape(1, kc)

    itemsize = x2d.dtype.itemsize
    target, vmem_limit = _chip_params()
    tile_rp = _pick_tile(rp, kc * itemsize, _sublane_align(x2d.dtype),
                         target, min_blocks=2)
    grid = (pl.cdiv(rp, tile_rp),)

    cost = pl.CostEstimate(
        flops=8 * rows * c + 4 * 2 * rp * kc * k,     # elementwise + four tiny matmuls
        transcendentals=rows,
        bytes_accessed=2 * rows * c * itemsize + 2 * kc * 4)

    out = pl.pallas_call(
        functools.partial(_ln_packed_kernel, k=k, c=c, eps=eps),
        out_shape=jax.ShapeDtypeStruct((rp, kc), x2d.dtype),
        grid_spec=pltpu.PrefetchScalarGridSpec(
            num_scalar_prefetch=0,
            grid=grid,
            in_specs=[
                pl.BlockSpec((tile_rp, kc), lambda i: (i, 0)),
                pl.BlockSpec((1, kc), lambda i: (0, 0)),
                pl.BlockSpec((1, kc), lambda i: (0, 0)),
            ],
            out_specs=pl.BlockSpec((tile_rp, kc), lambda i: (i, 0)),
        ),
        compiler_params=pltpu.CompilerParams(
            dimension_semantics=("parallel",),
            vmem_limit_bytes=vmem_limit),
        cost_estimate=cost,
    )(xp, w_tiled, b_tiled)
    return out.reshape(rows, c)


def _layernorm_channels_first(x, weight, bias, eps):
    bsz, c, h, w = x.shape
    hw = h * w
    x3 = x.reshape(bsz, c, hw)
    w3 = weight.reshape(1, c, 1)
    b3 = bias.reshape(1, c, 1)

    itemsize = x.dtype.itemsize
    target, vmem_limit = _chip_params()
    sub = _sublane_align(x.dtype)
    # Padded VMEM footprint of one image's (C, hw) slab.
    per_image = _round_up(c, sub) * _round_up(hw, 128) * itemsize
    if per_image <= target:
        # Small images: keep hw whole and batch several images per block.
        tile_hw = hw
        tile_b = max(1, min(bsz, target // per_image))
    else:
        tile_b = 1
        tile_hw = _pick_tile(hw, _round_up(c, sub) * itemsize, 128, target)
    # Keep >= 2 total grid steps when possible (v7x megacore).
    if pl.cdiv(bsz, tile_b) * pl.cdiv(hw, tile_hw) < 2:
        if bsz >= 2:
            tile_b = pl.cdiv(bsz, 2)
        elif tile_hw > 128:
            tile_hw = _round_up(pl.cdiv(hw, 2), 128)
    grid = (pl.cdiv(bsz, tile_b), pl.cdiv(hw, tile_hw))

    cost = pl.CostEstimate(
        flops=8 * bsz * c * hw,
        transcendentals=bsz * hw,
        bytes_accessed=2 * bsz * c * hw * itemsize + 2 * c * weight.dtype.itemsize)

    out = pl.pallas_call(
        functools.partial(_ln_cf_kernel, eps=eps),
        out_shape=jax.ShapeDtypeStruct((bsz, c, hw), x.dtype),
        grid_spec=pltpu.PrefetchScalarGridSpec(
            num_scalar_prefetch=0,
            grid=grid,
            in_specs=[
                pl.BlockSpec((tile_b, c, tile_hw), lambda i, j: (i, 0, j)),
                pl.BlockSpec((1, c, 1), lambda i, j: (0, 0, 0)),
                pl.BlockSpec((1, c, 1), lambda i, j: (0, 0, 0)),
            ],
            out_specs=pl.BlockSpec((tile_b, c, tile_hw), lambda i, j: (i, 0, j)),
        ),
        compiler_params=pltpu.CompilerParams(
            dimension_semantics=("parallel", "parallel"),
            vmem_limit_bytes=vmem_limit),
        cost_estimate=cost,
    )(x3, w3, b3)
    return out.reshape(bsz, c, h, w)


def layer_norm(x, weight, bias, eps=1e-6, data_format="channels_last"):
    """Forward pass of the PyTorch LayerNorm module.

    channels_last : normalize over the last axis (F.layer_norm semantics).
    channels_first: x is (B, C, H, W), normalize over axis 1 (manual branch).
    """
    if data_format not in ("channels_last", "channels_first"):
        raise NotImplementedError

    if data_format == "channels_first":
        return _layernorm_channels_first(x, weight, bias, eps)

    c = x.shape[-1]
    rows = int(math.prod(x.shape[:-1]))
    x2d = x.reshape(rows, c)
    if c % 128 == 0:
        y = _layernorm_rows_simple(x2d, weight, bias, eps)      # already lane-dense
    else:
        k = 128 // math.gcd(c, 128)                              # pixels per packed row
        main = (rows // k) * k
        if main == 0:
            # Fewer rows than one pack group: tiny tensor, simple path is fine.
            y = _layernorm_rows_simple(x2d, weight, bias, eps, min_blocks=1)
        elif main == rows:
            y = _layernorm_rows_packed(x2d, weight, bias, eps, k)
        else:
            # Lane-dense packed kernel for the bulk; the <k-row remainder goes
            # through the simple kernel.  The slice/concat copies cost far less than
            # running the whole tensor through lane-sparse masked stores.
            y_main = _layernorm_rows_packed(x2d[:main], weight, bias, eps, k)
            y_rem = _layernorm_rows_simple(x2d[main:], weight, bias, eps, min_blocks=1)
            y = jnp.concatenate([y_main, y_rem], axis=0)
    return y.reshape(x.shape)


# ---------------------------------------------------------------------------
# Reference + test
# ---------------------------------------------------------------------------

def _reference(x, weight, bias, eps, data_format):
    x = x.astype(jnp.float32)
    weight = weight.astype(jnp.float32)
    bias = bias.astype(jnp.float32)
    if data_format == "channels_last":
        u = jnp.mean(x, axis=-1, keepdims=True)
        s = jnp.mean((x - u) ** 2, axis=-1, keepdims=True)
        return (x - u) / jnp.sqrt(s + eps) * weight + bias
    else:
        u = jnp.mean(x, axis=1, keepdims=True)
        s = jnp.mean((x - u) ** 2, axis=1, keepdims=True)
        xn = (x - u) / jnp.sqrt(s + eps)
        return weight[None, :, None, None] * xn + bias[None, :, None, None]


if __name__ == "__main__":
    key = jax.random.PRNGKey(0)
    k1, k2, k3, k4, k5 = jax.random.split(key, 5)
    eps = 1e-6

    C = 4
    weight = 1.0 + 0.1 * jnp.arange(C, dtype=jnp.float32)
    bias = 0.01 * jnp.arange(C, dtype=jnp.float32)

    # channels_first: (B, C, H, W) — direct NCHW kernel, batch-tiled blocks.
    x_cf = jax.random.normal(k1, (2, C, 16, 16), dtype=jnp.float32)
    y_cf = jax.block_until_ready(layer_norm(x_cf, weight, bias, eps, "channels_first"))
    assert jnp.allclose(y_cf, _reference(x_cf, weight, bias, eps, "channels_first"),
                        atol=1e-4, rtol=1e-4)

    # channels_last, small C: packed lane-dense kernel (k = 32 pixels per row).
    x_cl = jax.random.normal(k2, (2, 16, 16, C), dtype=jnp.float32)
    y_cl = jax.block_until_ready(layer_norm(x_cl, weight, bias, eps, "channels_last"))
    assert jnp.allclose(y_cl, _reference(x_cl, weight, bias, eps, "channels_last"),
                        atol=1e-4, rtol=1e-4)

    # channels_last, pixel count not divisible by the pack factor: packed bulk + tiny
    # simple remainder (no lane-sparse full-tensor fallback anymore).
    x_rg = jax.random.normal(k3, (2, 5, 7, C), dtype=jnp.float32)
    y_rg = jax.block_until_ready(layer_norm(x_rg, weight, bias, eps, "channels_last"))
    assert jnp.allclose(y_rg, _reference(x_rg, weight, bias, eps, "channels_last"),
                        atol=1e-4, rtol=1e-4)

    # channels_last with C a multiple of 128: simple lane-dense rows kernel.
    C2 = 128
    weight2 = 1.0 + 0.001 * jnp.arange(C2, dtype=jnp.float32)
    bias2 = 0.001 * jnp.arange(C2, dtype=jnp.float32)
    x_big = jax.random.normal(k4, (2, 4, 4, C2), dtype=jnp.float32)
    y_big = jax.block_until_ready(layer_norm(x_big, weight2, bias2, eps, "channels_last"))
    assert jnp.allclose(y_big, _reference(x_big, weight2, bias2, eps, "channels_last"),
                        atol=1e-4, rtol=1e-4)

    # bf16 channels_last: exercises the native-bf16 sum matmul in the packed kernel.
    x_bf = jax.random.normal(k5, (2, 8, 8, C), dtype=jnp.bfloat16)
    y_bf = jax.block_until_ready(layer_norm(x_bf, weight, bias, eps, "channels_last"))
    ref_bf = _reference(x_bf, weight, bias, eps, "channels_last")
    assert jnp.allclose(y_bf.astype(jnp.float32), ref_bf, atol=5e-2, rtol=5e-2)

    print("KERNEL_OK")
</pallas_src>

<mosaic_0001>
module attributes {stable_mosaic.version = 11 : i64} {
  func.func @_ln_cf_kernel(%arg0: i32, %arg1: i32, %arg2: memref<1x4x256xf32, #tpu.memory_space<vmem>>, %arg3: memref<1x4x1xf32, #tpu.memory_space<vmem>>, %arg4: memref<1x4x1xf32, #tpu.memory_space<vmem>>, %arg5: memref<1x4x256xf32, #tpu.memory_space<vmem>>) attributes {dimension_semantics = [#tpu.dimension_semantics<parallel>, #tpu.dimension_semantics<parallel>], iteration_bounds = array<i64: 2, 1>, scalar_prefetch = 0 : i64, scratch_operands = 0 : i64, tpu.core_type = #tpu.core_type<tc>, window_params = [{transform_indices = @transform_0, window_bounds = array<i64: 1, 4, 256>}, {pipeline_mode = #tpu.pipeline_mode<synchronous>, transform_indices = @transform_1, window_bounds = array<i64: 1, 4, 1>}, {pipeline_mode = #tpu.pipeline_mode<synchronous>, transform_indices = @transform_2, window_bounds = array<i64: 1, 4, 1>}, {transform_indices = @transform_3, window_bounds = array<i64: 1, 4, 256>}]} {
    %c0 = arith.constant 0 : index
    %c0_0 = arith.constant 0 : index
    %c0_1 = arith.constant 0 : index
    %0 = vector.load %arg2[%c0, %c0_0, %c0_1] : memref<1x4x256xf32, #tpu.memory_space<vmem>>, vector<1x4x256xf32>
    %cst = arith.constant dense<0.000000e+00> : vector<1x256xf32>
    %1 = vector.multi_reduction <add>, %0, %cst [1] : vector<1x4x256xf32> to vector<1x256xf32>
    %2 = vector.shape_cast %1 : vector<1x256xf32> to vector<1x1x256xf32>
    %cst_2 = arith.constant 4.000000e+00 : f32
    %3 = vector.broadcast %cst_2 : f32 to vector<1x1x256xf32>
    %4 = arith.divf %2, %3 : vector<1x1x256xf32>
    %5 = vector.broadcast %4 : vector<1x1x256xf32> to vector<1x4x256xf32>
    %6 = arith.subf %0, %5 : vector<1x4x256xf32>
    %7 = arith.mulf %6, %6 : vector<1x4x256xf32>
    %cst_3 = arith.constant dense<0.000000e+00> : vector<1x256xf32>
    %8 = vector.multi_reduction <add>, %7, %cst_3 [1] : vector<1x4x256xf32> to vector<1x256xf32>
    %9 = vector.shape_cast %8 : vector<1x256xf32> to vector<1x1x256xf32>
    %cst_4 = arith.constant 4.000000e+00 : f32
    %10 = vector.broadcast %cst_4 : f32 to vector<1x1x256xf32>
    %11 = arith.divf %9, %10 : vector<1x1x256xf32>
    %cst_5 = arith.constant 9.99999997E-7 : f32
    %12 = vector.broadcast %cst_5 : f32 to vector<1x1x256xf32>
    %13 = arith.addf %11, %12 : vector<1x1x256xf32>
    %14 = math.rsqrt %13 : vector<1x1x256xf32>
    %15 = vector.broadcast %14 : vector<1x1x256xf32> to vector<1x4x256xf32>
    %16 = arith.mulf %6, %15 : vector<1x4x256xf32>
    %c0_6 = arith.constant 0 : index
    %c0_7 = arith.constant 0 : index
    %c0_8 = arith.constant 0 : index
    %17 = vector.load %arg3[%c0_6, %c0_7, %c0_8] : memref<1x4x1xf32, #tpu.memory_space<vmem>>, vector<1x4x1xf32>
    %c0_9 = arith.constant 0 : index
    %c0_10 = arith.constant 0 : index
    %c0_11 = arith.constant 0 : index
    %18 = vector.load %arg4[%c0_9, %c0_10, %c0_11] : memref<1x4x1xf32, #tpu.memory_space<vmem>>, vector<1x4x1xf32>
    %19 = vector.broadcast %17 : vector<1x4x1xf32> to vector<1x4x256xf32>
    %20 = arith.mulf %16, %19 : vector<1x4x256xf32>
    %21 = vector.broadcast %18 : vector<1x4x1xf32> to vector<1x4x256xf32>
    %22 = arith.addf %20, %21 : vector<1x4x256xf32>
    %c0_12 = arith.constant 0 : index
    %c0_13 = arith.constant 0 : index
    %c0_14 = arith.constant 0 : index
    %23 = vector.load %arg5[%c0_12, %c0_13, %c0_14] : memref<1x4x256xf32, #tpu.memory_space<vmem>>, vector<1x4x256xf32>
    tpu.vector_store %arg5[%c0_12, %c0_13, %c0_14], %22 {strides = array<i32>} : memref<1x4x256xf32, #tpu.memory_space<vmem>>, vector<1x4x256xf32>,
    return
  }
  func.func @transform_0(%arg0: i32, %arg1: i32) -> (i32, i32, i32) {
    %c0_i32 = arith.constant 0 : i32
    %c0_i32_0 = arith.constant 0 : i32
    return %arg0, %c0_i32, %arg1 : i32, i32, i32
  }
  func.func @transform_1(%arg0: i32, %arg1: i32) -> (i32, i32, i32) {
    %c0_i32 = arith.constant 0 : i32
    %c0_i32_0 = arith.constant 0 : i32
    %c0_i32_1 = arith.constant 0 : i32
    %c0_i32_2 = arith.constant 0 : i32
    return %c0_i32, %c0_i32_0, %c0_i32_1 : i32, i32, i32
  }
  func.func @transform_2(%arg0: i32, %arg1: i32) -> (i32, i32, i32) {
    %c0_i32 = arith.constant 0 : i32
    %c0_i32_0 = arith.constant 0 : i32
    %c0_i32_1 = arith.constant 0 : i32
    %c0_i32_2 = arith.constant 0 : i32
    return %c0_i32, %c0_i32_0, %c0_i32_1 : i32, i32, i32
  }
  func.func @transform_3(%arg0: i32, %arg1: i32) -> (i32, i32, i32) {
    %c0_i32 = arith.constant 0 : i32
    %c0_i32_0 = arith.constant 0 : i32
    return %arg0, %c0_i32, %arg1 : i32, i32, i32
  }
}

</mosaic_0001>

<llo_original>
// kernel: tpu_custom_call.1
$region0: #{tpu_custom_call.1}
  #allocation0 [shape = 'u32[]', space=smem, size = 0x4, offset = 0x4, fixed_abs, tag = 'smem constant byte address 0x4 - core index']
  #allocation1 [shape = 'u32[144,128]{1,0:T(1,128)}', space=vmem, size = 0x12000, scoped, tag = 'internal scratch']
  %s0 = inlined_call_operand.hbm [shape: f32[2,4,256], index: 0, kind: input, shape index: {}]
  %s1 = inlined_call_operand.vmem [shape: f32[1,4,1], index: 1, kind: input, shape index: {}]
  %s2 = inlined_call_operand.vmem [shape: f32[1,4,1], index: 2, kind: input, shape index: {}]
  %s3 = inlined_call_operand.hbm [shape: f32[2,4,256], index: 3, kind: output, shape index: {}]
  %s4 = sld [smem:[#allocation0]]
  $region49: #{tpu_custom_call.1} parent=0
    _
  %s6 = ssub.s32 1, %s4
  %s7 = scalar_select 0, %s6, %s4
  $region1: #{tpu_custom_call.1} parent=0
    #allocation2 [shape = 'u8[8192]{0}', space=vmem, size = 0x2000, scoped, tag = 'input window, operand 0']
    #allocation3 [shape = 's32[2]{0}', space=sflag, size = 0x8, scoped, tag = 'scoped memory for tpu_custom_call.1']
    #allocation4 [shape = 's32[2]{0}', space=sflag, size = 0x8, scoped, tag = 'scoped memory for tpu_custom_call.1']
    #allocation5 [shape = 'u8[8192]{0}', space=vmem, size = 0x2000, scoped, tag = 'output window, operand 0']
    %8 = vsyncpa [#allocation3], 0
    %s9 = scalar_lea.sflag [#allocation3], 1
    %10 = vsyncpa %s9, 0
    %11 = vsyncpa [#allocation4], 0
    %s12 = scalar_lea.sflag [#allocation4], 1
    %13 = vsyncpa %s12, 0
    loop: start=0, step=1, limit=4
    $region2: #{tpu_custom_call.1} parent=1 // loop_pre_header
      _
    $region3: #{tpu_custom_call.1} parent=1 // loop_header
      %s15 = sphi 0, %s19
      %p16 = scmp.ge.s32.totalorder %s15, 4
      %s22 = sphi 0, %s34
      %s23 = sphi 0, %s30
      %s24 = sphi 0, %s22
      %s25 = sphi 0, %s23
      %s26 = sphi 0, %s24
      %s27 = sphi 0, %s25
      %s39 = sphi 0, %s41
      %s42 = sphi 0, %s39
      %s43 = sphi 0, %s42
      %s59 = sphi 0, %s43
      %s63 = sphi 0, %s63
      %s65 = sphi 0, %s63
      %s66 = sphi 0, %s65
      %s80 = sphi 0, %s66
      %s84 = sphi 0, %s84
      %s86 = sphi 0, %s84
      %s87 = sphi 0, %s86
      %s101 = sphi 0, %s87
      %s109 = sphi 0, %s111
      %s112 = sphi 0, %s109
      %s113 = sphi 0, %s112
      %s129 = sphi 0, %s113
    $region4: #{tpu_custom_call.1} parent=1 // loop_header_branch
      %18 = sbr.rel (%p16) target = $region8
    $region5: #{tpu_custom_call.1} parent=1 // loop_body
      %s20 = ssub.s32 %s15, 1
      %s21 = ssub.s32 %s15, 2
      %s28 = sadd.s32 1, %s23
      %p29 = scmp.ge.s32.totalorder %s28, 1
      %s30 = scalar_select %p29, 0, %s28
      %s31 = sadd.s32 1, %s22
      %s32 = scalar_select %p29, %s31, %s22
      %p33 = scmp.ge.s32.totalorder %s32, 2
      %s34 = scalar_select %p33, 0, %s32
      %s35 = ssub.s32 %s22, %s34
      %s36 = ssub.s32 %s23, %s30
      %s37 = sor.u32 %s35, %s36
      %p38 = scmp.eq.s32.totalorder %s37, 0
      %s40 = sadd.s32 %s39, 1
      %s41 = scalar_select %p38, %s39, %s40
      %p44 = pneg %p38
      %p45 = scmp.eq.s32.totalorder %s15, 1
      %p46 = por %p44, %p45
      %p47 = scmp.ne.s32.totalorder %s39, %s42
      %p48 = scmp.eq.s32.totalorder %s15, 0
      %p49 = por %p47, %p48
      %p50 = scmp.ne.s32.totalorder %s39, %s42
      %p51 = scmp.eq.s32.totalorder %s20, 1
      %p52 = por %p50, %p51
      %p53 = scmp.ne.s32.totalorder %s42, %s43
      %p54 = scmp.eq.s32.totalorder %s20, 0
      %p55 = por %p53, %p54
      %p56 = scmp.ne.s32.totalorder %s42, %s43
      %p57 = scmp.eq.s32.totalorder %s21, 1
      %p58 = por %p56, %p57
      %p60 = scmp.ne.s32.totalorder %s43, %s59
      %p61 = scmp.eq.s32.totalorder %s21, 0
      %p62 = por %p60, %p61
      %s64 = sadd.s32 %s63, 1
      %p67 = scmp.eq.s32.totalorder %s15, 1
      %p68 = scmp.ne.s32.totalorder %s63, %s65
      %p69 = scmp.eq.s32.totalorder %s15, 0
      %p70 = por %p68, %p69
      %p71 = scmp.ne.s32.totalorder %s63, %s65
      %p72 = scmp.eq.s32.totalorder %s20, 1
      %p73 = por %p71, %p72
      %p74 = scmp.ne.s32.totalorder %s65, %s66
      %p75 = scmp.eq.s32.totalorder %s20, 0
      %p76 = por %p74, %p75
      %p77 = scmp.ne.s32.totalorder %s65, %s66
      %p78 = scmp.eq.s32.totalorder %s21, 1
      %p79 = por %p77, %p78
      %p81 = scmp.ne.s32.totalorder %s66, %s80
      %p82 = scmp.eq.s32.totalorder %s21, 0
      %p83 = por %p81, %p82
      %s85 = sadd.s32 %s84, 1
      %p88 = scmp.eq.s32.totalorder %s15, 1
      %p89 = scmp.ne.s32.totalorder %s84, %s86
      %p90 = scmp.eq.s32.totalorder %s15, 0
      %p91 = por %p89, %p90
      %p92 = scmp.ne.s32.totalorder %s84, %s86
      %p93 = scmp.eq.s32.totalorder %s20, 1
      %p94 = por %p92, %p93
      %p95 = scmp.ne.s32.totalorder %s86, %s87
      %p96 = scmp.eq.s32.totalorder %s20, 0
      %p97 = por %p95, %p96
      %p98 = scmp.ne.s32.totalorder %s86, %s87
      %p99 = scmp.eq.s32.totalorder %s21, 1
      %p100 = por %p98, %p99
      %p102 = scmp.ne.s32.totalorder %s87, %s101
      %p103 = scmp.eq.s32.totalorder %s21, 0
      %p104 = por %p102, %p103
      %s105 = ssub.s32 %s22, %s34
      %s106 = ssub.s32 %s23, %s30
      %s107 = sor.u32 %s105, %s106
      %p108 = scmp.eq.s32.totalorder %s107, 0
      %s110 = sadd.s32 %s109, 1
      %s111 = scalar_select %p108, %s109, %s110
      %p114 = pneg %p108
      %p115 = scmp.eq.s32.totalorder %s15, 1
      %p116 = por %p114, %p115
      %p117 = scmp.ne.s32.totalorder %s109, %s112
      %p118 = scmp.eq.s32.totalorder %s15, 0
      %p119 = por %p117, %p118
      %p120 = scmp.ne.s32.totalorder %s109, %s112
      %p121 = scmp.eq.s32.totalorder %s20, 1
      %p122 = por %p120, %p121
      %p123 = scmp.ne.s32.totalorder %s112, %s113
      %p124 = scmp.eq.s32.totalorder %s20, 0
      %p125 = por %p123, %p124
      %p126 = scmp.ne.s32.totalorder %s112, %s113
      %p127 = scmp.eq.s32.totalorder %s21, 1
      %p128 = por %p126, %p127
      %p130 = scmp.ne.s32.totalorder %s113, %s129
      %p131 = scmp.eq.s32.totalorder %s21, 0
      %p132 = por %p130, %p131
      %p133 = scmp.le.s32.totalorder 1, %s15
      %p134 = scmp.lt.s32.totalorder %s15, 3
      %p135 = pnand %p133, %p134
      %p136 = pneg %p135
      // Predicated region
      $region9: #{tpu_custom_call.1} parent=5 // pred_check
        _
      $region10: #{tpu_custom_call.1} parent=5 // pred_check_branch
        %138 = sbr.rel (%p135) target = $region12
      $region11: #{tpu_custom_call.1} parent=5 // pred_region
        %s139 = ssub.s32 %s15, 1
        // Predicated region
        $region13: #{tpu_custom_call.1} parent=11 // pred_check
          %p140 = pneg %p76
        $region14: #{tpu_custom_call.1} parent=11 // pred_check_branch
          %142 = sbr.rel (%p140) target = $region16
        $region15: #{tpu_custom_call.1} parent=11 // pred_region
          _
        $region16: #{tpu_custom_call.1} parent=11 // pred_fallthru
          _
        // Predicated region
        $region17: #{tpu_custom_call.1} parent=11 // pred_check
          %p143 = pneg %p97
        $region18: #{tpu_custom_call.1} parent=11 // pred_check_branch
          %145 = sbr.rel (%p143) target = $region20
        $region19: #{tpu_custom_call.1} parent=11 // pred_region
          _
        $region20: #{tpu_custom_call.1} parent=11 // pred_fallthru
          _
      $region12: #{tpu_custom_call.1} parent=5 // pred_fallthru
        _
      %p146 = scmp.lt.s32.totalorder %s15, 2
      // Predicated region
      $region21: #{tpu_custom_call.1} parent=5 // pred_check
        %p147 = pneg %p146
      $region22: #{tpu_custom_call.1} parent=5 // pred_check_branch
        %149 = sbr.rel (%p147) target = $region24
      $region23: #{tpu_custom_call.1} parent=5 // pred_region
        // Predicated region
        $region25: #{tpu_custom_call.1} parent=23 // pred_check
          %p150 = pneg %p49
        $region26: #{tpu_custom_call.1} parent=23 // pred_check_branch
          %152 = sbr.rel (%p150) target = $region28
        $region27: #{tpu_custom_call.1} parent=23 // pred_region
          %s153 = sand.u32 %s39, 1
          %s154 = scalar_lea.sflag [#allocation3], %s153
          %s155 = sand.u32 %s39, 1
          %s156 = smul.addr %s155, 8
          %s157 = scalar_lea.vmem [#allocation2], %s156
          %s158 = smul.u32 2, %s23
          %s160 = ssub.s32 128, 128
          %161 = vsyncadd %s154, %s160
          %s162 = smul.addr %s22, 2
          %s163 = sadd.s32 %s158, %s162
          %s164 = smul.addr %s163, 64
          %s165 = scalar_lea.hbm %s0, %s164
          %s167 = sshll.u32 %s157, 4
          %s168 = int_to_ptr.vmem [resolvable:$true] %s167
          %170 = dma.hbm_to_vmem [thread:$0]  %s165, 128, %s168, %s154
        $region28: #{tpu_custom_call.1} parent=23 // pred_fallthru
          _
      $region24: #{tpu_custom_call.1} parent=5 // pred_fallthru
        _
      %p171 = scmp.le.s32.totalorder 1, %s15
      %p172 = scmp.lt.s32.totalorder %s15, 3
      %p173 = pnand %p171, %p172
      %p174 = pneg %p173
      // Predicated region
      $region29: #{tpu_custom_call.1} parent=5 // pred_check
        _
      $region30: #{tpu_custom_call.1} parent=5 // pred_check_branch
        %176 = sbr.rel (%p173) target = $region32
      $region31: #{tpu_custom_call.1} parent=5 // pred_region
        %s177 = ssub.s32 %s15, 1
        %s178 = sand.u32 %s42, 1
        %s179 = scalar_lea.sflag [#allocation3], %s178
        %s180 = sand.u32 %s42, 1
        %s181 = smul.addr %s180, 8
        %s182 = scalar_lea.vmem [#allocation2], %s181
        // Predicated region
        $region33: #{tpu_custom_call.1} parent=31 // pred_check
          %p183 = pneg %p55
        $region34: #{tpu_custom_call.1} parent=31 // pred_check_branch
          %185 = sbr.rel (%p183) target = $region36
        $region35: #{tpu_custom_call.1} parent=31 // pred_region
          %186 = dma.done %s179, 128
        $region36: #{tpu_custom_call.1} parent=31 // pred_fallthru
          _
        %s187 = sand.u32 %s42, 1
        %s188 = scalar_lea.sflag [#allocation3], %s187
        %s189 = sand.u32 %s42, 1
        %s190 = smul.addr %s189, 8
        %s191 = scalar_lea.vmem [#allocation2], %s190
        %p192 = pneg %p55
        %p193 = pneg %p52
        %p194 = pneg %p76
        %p195 = pneg %p73
        %p196 = pneg %p97
        %p197 = pneg %p94
        %p198 = pneg %p125
        %p199 = pneg %p122
        %s200 = sand.u32 %s112, 1
        %s201 = scalar_lea.sflag [#allocation4], %s200
        %s202 = sand.u32 %s112, 1
        %s203 = smul.addr %s202, 8
        %s204 = scalar_lea.vmem [#allocation5], %s203
        %s205 = smul.u32 2, %s25
        %s206 = smul.u32 2, %s25
        %v207 = vld [vmem:[%s182] sm:$0xff]
        %v209 = vcombine.high %v207, %v207
        %vm211 = vcmask 1043456
        %v212 = vsel %vm211, %v207, 0.0
        %v213 = vrot.slane %v212, 4
        %v214 = vadd.f32 %v212, %v213
        %v215 = vrot.slane %v214, 2
        %v216 = vadd.f32 %v214, %v215
        %v217 = vrot.slane %v216, 1
        %v218 = vadd.f32 %v216, %v217
        %v219 = vsel %vm211, %v209, 0.0
        %v220 = vrot.slane %v219, 4
        %v221 = vadd.f32 %v219, %v220
        %v222 = vrot.slane %v221, 2
        %v223 = vadd.f32 %v221, %v222
        %v224 = vrot.slane %v223, 1
        %v225 = vadd.f32 %v223, %v224
        %v226 = vrcp.pop 4.0
        %v227 = vmul.f32 %v218, %v226
        %v228 = vmul.f32 %v225, %v226
        %v231 = vcombine.low %v227, %v228
        %v233 = vsub.f32 %v207, %v231
        %v234 = vmul.f32 %v233, %v233
        %v236 = vcombine.high %v234, %v234
        %v238 = vsel %vm211, %v234, 0.0
        %v239 = vrot.slane %v238, 4
        %v240 = vadd.f32 %v238, %v239
        %v241 = vrot.slane %v240, 2
        %v242 = vadd.f32 %v240, %v241
        %v243 = vrot.slane %v242, 1
        %v244 = vadd.f32 %v242, %v243
        %v245 = vsel %vm211, %v236, 0.0
        %v246 = vrot.slane %v245, 4
        %v247 = vadd.f32 %v245, %v246
        %v248 = vrot.slane %v247, 2
        %v249 = vadd.f32 %v247, %v248
        %v250 = vrot.slane %v249, 1
        %v251 = vadd.f32 %v249, %v250
        %v252 = vmul.f32 %v244, %v226
        %v253 = vmul.f32 %v251, %v226
        %v254 = vadd.f32 %v252, 1e-06
        %v255 = vadd.f32 %v253, 1e-06
        %v256 = vrsqrt.pop %v254
        %v257 = vrsqrt.pop %v255
        %v260 = vcombine.low %v256, %v257
        %v262 = vmul.f32 %v233, %v260
        %v263 = vld [vmem:[%s1] sm:$0xf]
        %v264 = vld [vmem:[%s2] sm:$0xf]
        %266 = vset.pattern.permute.xlu0 0
        %267 = vperm.xlu0 %266, %v263
        %v268 = vpop.permute.xlu0 %267
        %v270 = vunpack.c.l.s4 839922192
        %v271 = vunpack.c.0.s8 %v270
        %v272 = vlaneseq
        %v273 = vshrl.u32 %v272, 7
        %v274 = vsub.s32 %v271, %v273
        %v275 = vrot.slane %v268, %v274
        %v277 = vmul.f32 %v262, %v275
        %279 = vset.pattern.permute.xlu0 0
        %280 = vperm.xlu0 %279, %v264
        %v281 = vpop.permute.xlu0 %280
        %v283 = vunpack.c.l.s4 839922192
        %v284 = vunpack.c.0.s8 %v283
        %v285 = vlaneseq
        %v286 = vshrl.u32 %v285, 7
        %v287 = vsub.s32 %v284, %v286
        %v288 = vrot.slane %v281, %v287
        %v290 = vadd.f32 %v277, %v288
        %291 = vst [vmem:[%s204] sm:$0xff] %v290
        %s292 = sand.u32 %s112, 1
        %s293 = scalar_lea.sflag [#allocation4], %s292
        %s294 = sand.u32 %s112, 1
        %s295 = smul.addr %s294, 8
        %s296 = scalar_lea.vmem [#allocation5], %s295
        // Predicated region
        $region37: #{tpu_custom_call.1} parent=31 // pred_check
          %p297 = pneg %p122
        $region38: #{tpu_custom_call.1} parent=31 // pred_check_branch
          %299 = sbr.rel (%p297) target = $region40
        $region39: #{tpu_custom_call.1} parent=31 // pred_region
          %s300 = smul.u32 2, %s25
          %s302 = ssub.s32 128, 128
          %303 = vsyncadd %s293, %s302
          %s304 = smul.addr %s24, 2
          %s305 = sadd.s32 %s300, %s304
          %s306 = smul.addr %s305, 64
          %s307 = scalar_lea.hbm %s3, %s306
          %s309 = sshll.u32 %s296, 4
          %s310 = int_to_ptr.vmem [resolvable:$true] %s309
          %312 = dma.vmem_to_hbm [thread:$0]  %s310, 128, %s307, %s293
        $region40: #{tpu_custom_call.1} parent=31 // pred_fallthru
          _
      $region32: #{tpu_custom_call.1} parent=5 // pred_fallthru
        _
      %p313 = scmp.le.s32.totalorder 2, %s15
      // Predicated region
      $region41: #{tpu_custom_call.1} parent=5 // pred_check
        %p314 = pneg %p313
      $region42: #{tpu_custom_call.1} parent=5 // pred_check_branch
        %316 = sbr.rel (%p314) target = $region44
      $region43: #{tpu_custom_call.1} parent=5 // pred_region
        %s317 = ssub.s32 %s15, 2
        // Predicated region
        $region45: #{tpu_custom_call.1} parent=43 // pred_check
          %p318 = pneg %p128
        $region46: #{tpu_custom_call.1} parent=43 // pred_check_branch
          %320 = sbr.rel (%p318) target = $region48
        $region47: #{tpu_custom_call.1} parent=43 // pred_region
          %s321 = sand.u32 %s113, 1
          %s322 = scalar_lea.sflag [#allocation4], %s321
          %s323 = sand.u32 %s113, 1
          %s324 = smul.addr %s323, 8
          %s325 = scalar_lea.vmem [#allocation5], %s324
          %326 = dma.done %s322, 128
        $region48: #{tpu_custom_call.1} parent=43 // pred_fallthru
          _
      $region44: #{tpu_custom_call.1} parent=5 // pred_fallthru
        _
    $region6: #{tpu_custom_call.1} parent=1 // loop_footer
      %s19 = sadd.s32 1, %s15
    $region7: #{tpu_custom_call.1} parent=1 // loop_footer_branch
      %14 = sbr.rel target = $region3
    $region8: #{tpu_custom_call.1} parent=1 // loop_exit
      _
    %327 = vsyncpa [#allocation3], 1
    %s328 = scalar_lea.sflag [#allocation3], 1
    %329 = vsyncpa %s328, 1
    %330 = vsyncpa [#allocation4], 1
    %s331 = scalar_lea.sflag [#allocation4], 1
    %332 = vsyncpa %s331, 1

</llo_original>
